<compile_context>
chip_gen: v7x
topology: tpu7x:2x2x1
jax: 0.10.0
libtpu: 0.0.40
codegen_flags: <defaults>
</compile_context>

<pallas_src>
import jax
import jax.numpy as jnp
from jax.experimental import pallas as pl
from jax.experimental.pallas import tpu as pltpu


# ---------------------------------------------------------------------------
# Shared in-kernel helper
# ---------------------------------------------------------------------------
def _mlp_sigmoid(avg3, mx3, w1cr, w2cr):
    """1x1-conv MLP + sigmoid with channels kept on the sublane axis.

    avg3, mx3: (R, C, 1) f32 pooled stats.
    w1cr:      (C, C_red) f32  (= first 1x1-conv weight, transposed once outside).
    w2cr:      (C, C_red) f32  (= second 1x1-conv weight, original layout).
    Returns (R, C, 1) f32 attention. Pure VPU/XLU: C_red is tiny, so an MXU matmul
    would be <1% utilized and would just add weight-push/FIFO latency to the serial
    reduce -> sigmoid -> scale path.
    """
    def fc(p3):                                                      # (R, C, 1)
        # h[r, j] = relu( sum_c p[r, c] * w1cr[c, j] )
        h = jnp.maximum(jnp.sum(p3 * w1cr[None, :, :], axis=1), 0.0)  # (R, C_red)
        # logits[r, c] = sum_j h[r, j] * w2cr[c, j]
        return jnp.sum(h[:, None, :] * w2cr[None, :, :], axis=-1,
                       keepdims=True)                                 # (R, C, 1)

    return jax.nn.sigmoid(fc(avg3) + fc(mx3))


# ---------------------------------------------------------------------------
# Fast path: everything fits in VMEM -> single invocation, no grid, no pipeline
# ---------------------------------------------------------------------------
def _ca_fused_kernel(x_ref, w1_ref, w2_ref, o_ref):
    x = x_ref[...]                                                    # (B, C, HW)
    # Pooled stats without materializing a full-size f32 copy of x.
    avg3 = jnp.mean(x, axis=-1, keepdims=True, dtype=jnp.float32)     # (B, C, 1)
    mx3 = jnp.max(x, axis=-1, keepdims=True).astype(jnp.float32)      # (B, C, 1)
    att3 = _mlp_sigmoid(avg3, mx3,
                        w1_ref[...].astype(jnp.float32),
                        w2_ref[...].astype(jnp.float32))              # (B, C, 1) f32
    # Multiply in f32, cast once on store (matches reference numerics).
    o_ref[...] = (x.astype(jnp.float32) * att3).astype(o_ref.dtype)


def _channel_attention_fused(x3, w1cr, w2cr):
    B, C, HW = x3.shape
    C_red = w1cr.shape[1]
    bytes_x = x3.size * x3.dtype.itemsize
    cost = pl.CostEstimate(
        flops=4 * B * C * HW + 8 * B * C * C_red,
        transcendentals=B * C,
        bytes_accessed=2 * bytes_x
        + w1cr.size * w1cr.dtype.itemsize
        + w2cr.size * w2cr.dtype.itemsize,
    )
    # No grid / no BlockSpecs: whole arrays are placed in VMEM single-buffered, so
    # there is no double-buffering or pipeline bookkeeping for this tiny op.
    return pl.pallas_call(
        _ca_fused_kernel,
        out_shape=jax.ShapeDtypeStruct((B, C, HW), x3.dtype),
        cost_estimate=cost,
    )(x3, w1cr, w2cr)


# ---------------------------------------------------------------------------
# Scale-aware path: grid over (batch, HW tiles); accumulate pooled stats, then scale
# ---------------------------------------------------------------------------
def _pick_hw_tile(hw, c, itemsize, max_block_bytes=2 * 1024 * 1024):
    """Largest multiple of 128 that divides HW and keeps a (1, C, t) block small."""
    if hw % 128 != 0:
        return hw                      # whole-HW blocks; grid over batch only
    max_elems = max(128, max_block_bytes // max(1, c * itemsize))
    best, t = 128, 128
    while t <= hw:
        if hw % t == 0 and t <= max_elems:
            best = t
        t += 128
    return best


def _channel_attention_tiled(x3, w1cr, w2cr, *, hw_tile=None):
    B, C, HW = x3.shape
    C_red = w1cr.shape[1]
    t_hw = hw_tile if hw_tile is not None else _pick_hw_tile(HW, C, x3.dtype.itemsize)
    assert HW % t_hw == 0, "HW tile must divide H*W"
    n_t = HW // t_hw
    inv_hw = 1.0 / float(HW)

    # ---- pass 1: pooled sum/max accumulated over HW tiles, MLP+sigmoid at the end ----
    def pool_att_kernel(x_ref, w1_ref, w2_ref, att_ref, sum_sc, max_sc):
        t = pl.program_id(1)

        @pl.when(t == 0)
        def _init():
            sum_sc[...] = jnp.zeros_like(sum_sc)
            max_sc[...] = jnp.full_like(max_sc, -jnp.inf)

        xb = x_ref[...]                                               # (1, C, t_hw)
        sum_sc[...] += jnp.sum(xb, axis=-1, keepdims=True, dtype=jnp.float32)
        max_sc[...] = jnp.maximum(
            max_sc[...], jnp.max(xb, axis=-1, keepdims=True).astype(jnp.float32))

        @pl.when(t == pl.num_programs(1) - 1)
        def _finalize():
            avg3 = sum_sc[...] * inv_hw                               # (1, C, 1)
            att_ref[...] = _mlp_sigmoid(avg3, max_sc[...],
                                        w1_ref[...].astype(jnp.float32),
                                        w2_ref[...].astype(jnp.float32))

    att = pl.pallas_call(
        pool_att_kernel,
        out_shape=jax.ShapeDtypeStruct((B, C, 1), jnp.float32),
        grid=(B, n_t),
        in_specs=[
            pl.BlockSpec((1, C, t_hw), lambda b, t: (b, 0, t)),
            pl.BlockSpec((C, C_red), lambda b, t: (0, 0)),
            pl.BlockSpec((C, C_red), lambda b, t: (0, 0)),
        ],
        out_specs=pl.BlockSpec((1, C, 1), lambda b, t: (b, 0, 0)),
        scratch_shapes=[pltpu.VMEM((1, C, 1), jnp.float32),
                        pltpu.VMEM((1, C, 1), jnp.float32)],
        compiler_params=pltpu.CompilerParams(
            dimension_semantics=("parallel", "arbitrary")),
    )(x3, w1cr, w2cr)

    # ---- pass 2: elementwise scale, fully parallel / lane-dense output ----
    def scale_kernel(x_ref, att_ref, o_ref):
        o_ref[...] = (x_ref[...].astype(jnp.float32) * att_ref[...]).astype(o_ref.dtype)

    return pl.pallas_call(
        scale_kernel,
        out_shape=jax.ShapeDtypeStruct((B, C, HW), x3.dtype),
        grid=(B, n_t),
        in_specs=[
            pl.BlockSpec((1, C, t_hw), lambda b, t: (b, 0, t)),
            pl.BlockSpec((1, C, 1), lambda b, t: (b, 0, 0)),
        ],
        out_specs=pl.BlockSpec((1, C, t_hw), lambda b, t: (b, 0, t)),
        compiler_params=pltpu.CompilerParams(
            dimension_semantics=("parallel", "parallel")),
    )(x3, att)


# ---------------------------------------------------------------------------
# Public wrapper + one-time parameter preparation
# ---------------------------------------------------------------------------
# Conservative: in + out + weights single-buffered must fit even v5e's 16 MiB
# default scoped VMEM without needing compiler_params.
_VMEM_SAFE_BYTES_X = 6 * 1024 * 1024


def prepare_channel_attention_params(w1, w2):
    """One-time prep: both weights laid out as (C, C_red) so the kernel never transposes.

    w1: (C_red, C) first 1x1-conv weight; w2: (C, C_red) second 1x1-conv weight.
    """
    return jnp.transpose(w1), w2


def channel_attention(x, w1cr, w2cr, *, force_tiled=False, hw_tile=None):
    """x: (B, C, H, W); w1cr, w2cr: (C, C_red) prepared weights. Returns (B, C, H, W)."""
    B, C, H, W = x.shape
    HW = H * W
    x3 = x.reshape(B, C, HW)
    bytes_x = x3.size * x3.dtype.itemsize
    if not force_tiled and bytes_x <= _VMEM_SAFE_BYTES_X:
        y = _channel_attention_fused(x3, w1cr, w2cr)
    else:
        y = _channel_attention_tiled(x3, w1cr, w2cr, hw_tile=hw_tile)
    return y.reshape(B, C, H, W)


def channel_attention_ref(x, w1, w2):
    """Pure-JAX reference mirroring the PyTorch ChannelAttention.forward."""
    xf = x.astype(jnp.float32)
    avg = jnp.mean(xf, axis=(2, 3))                   # (B, C)
    mx = jnp.max(xf, axis=(2, 3))                     # (B, C)

    def fc(p):                                        # p: (B, C)
        h = jnp.maximum(p @ w1.T, 0.0)                # (B, C_red)
        return h @ w2.T                               # (B, C)

    att = jax.nn.sigmoid(fc(avg) + fc(mx))[:, :, None, None]
    return (xf * att).astype(x.dtype)


if __name__ == "__main__":
    # Shapes consistent with ChannelAttention(in_channels=32, reduction_ratio=16)
    B, C, H, W = 2, 32, 16, 16
    reduction_ratio = 16
    C_red = C // reduction_ratio                      # = 2

    key = jax.random.PRNGKey(0)
    kx, k1, k2 = jax.random.split(key, 3)
    x = jax.random.normal(kx, (B, C, H, W), dtype=jnp.float32)
    # Conv2d(C, C_red, 1, bias=False) weight (C_red, C, 1, 1) -> (C_red, C)
    w1 = jax.random.normal(k1, (C_red, C), dtype=jnp.float32) * 0.1
    # Conv2d(C_red, C, 1, bias=False) weight (C, C_red, 1, 1) -> (C, C_red)
    w2 = jax.random.normal(k2, (C, C_red), dtype=jnp.float32) * 0.1

    w1cr, w2cr = prepare_channel_attention_params(w1, w2)
    y_ref = channel_attention_ref(x, w1, w2)

    # Fast path: single VMEM block, no grid / pipeline machinery.
    y = channel_attention(x, w1cr, w2cr)
    jax.block_until_ready(y)
    assert jnp.allclose(y, y_ref, rtol=1e-5, atol=1e-5), "fused path mismatch vs reference"

    # Scale-aware tiled path (accumulate-then-scale), forced at this small shape to
    # exercise the pl.when init/finalize accumulation across HW tiles.
    y_t = channel_attention(x, w1cr, w2cr, force_tiled=True, hw_tile=128)
    jax.block_until_ready(y_t)
    assert jnp.allclose(y_t, y_ref, rtol=1e-5, atol=1e-5), "tiled path mismatch vs reference"

    print("KERNEL_OK")
</pallas_src>

<mosaic_0001>
module attributes {stable_mosaic.version = 11 : i64} {
  func.func @_ca_fused_kernel(%arg0: memref<2x32x256xf32, #tpu.memory_space<vmem>>, %arg1: memref<32x2xf32, #tpu.memory_space<vmem>>, %arg2: memref<32x2xf32, #tpu.memory_space<vmem>>, %arg3: memref<2x32x256xf32, #tpu.memory_space<vmem>>) attributes {dimension_semantics = [], scalar_prefetch = 0 : i64, scratch_operands = 0 : i64, tpu.core_type = #tpu.core_type<tc>} {
    %c0 = arith.constant 0 : index
    %c0_0 = arith.constant 0 : index
    %c0_1 = arith.constant 0 : index
    %0 = vector.load %arg0[%c0, %c0_0, %c0_1] : memref<2x32x256xf32, #tpu.memory_space<vmem>>, vector<2x32x256xf32>
    %cst = arith.constant dense<0.000000e+00> : vector<2x32xf32>
    %1 = vector.multi_reduction <add>, %0, %cst [2] : vector<2x32x256xf32> to vector<2x32xf32>
    %2 = vector.shape_cast %1 : vector<2x32xf32> to vector<2x32x1xf32>
    %cst_2 = arith.constant 2.560000e+02 : f32
    %3 = vector.broadcast %cst_2 : f32 to vector<2x32x1xf32>
    %4 = arith.divf %2, %3 : vector<2x32x1xf32>
    %cst_3 = arith.constant dense<0xFF800000> : vector<2x32xf32>
    %5 = vector.multi_reduction <maximumf>, %0, %cst_3 [2] : vector<2x32x256xf32> to vector<2x32xf32>
    %6 = vector.shape_cast %5 : vector<2x32xf32> to vector<2x32x1xf32>
    %c0_4 = arith.constant 0 : index
    %c0_5 = arith.constant 0 : index
    %7 = vector.load %arg1[%c0_4, %c0_5] : memref<32x2xf32, #tpu.memory_space<vmem>>, vector<32x2xf32>
    %c0_6 = arith.constant 0 : index
    %c0_7 = arith.constant 0 : index
    %8 = vector.load %arg2[%c0_6, %c0_7] : memref<32x2xf32, #tpu.memory_space<vmem>>, vector<32x2xf32>
    %9 = vector.shape_cast %7 : vector<32x2xf32> to vector<1x32x2xf32>
    %10 = vector.broadcast %4 : vector<2x32x1xf32> to vector<2x32x2xf32>
    %11 = vector.broadcast %9 : vector<1x32x2xf32> to vector<2x32x2xf32>
    %12 = arith.mulf %10, %11 : vector<2x32x2xf32>
    %cst_8 = arith.constant dense<0.000000e+00> : vector<2x2xf32>
    %13 = vector.multi_reduction <add>, %12, %cst_8 [1] : vector<2x32x2xf32> to vector<2x2xf32>
    %cst_9 = arith.constant 0.000000e+00 : f32
    %14 = vector.broadcast %cst_9 : f32 to vector<2x2xf32>
    %15 = arith.maximumf %13, %14 : vector<2x2xf32>
    %16 = vector.shape_cast %15 : vector<2x2xf32> to vector<2x1x2xf32>
    %17 = vector.shape_cast %8 : vector<32x2xf32> to vector<1x32x2xf32>
    %18 = vector.broadcast %16 : vector<2x1x2xf32> to vector<2x32x2xf32>
    %19 = vector.broadcast %17 : vector<1x32x2xf32> to vector<2x32x2xf32>
    %20 = arith.mulf %18, %19 : vector<2x32x2xf32>
    %cst_10 = arith.constant dense<0.000000e+00> : vector<2x32xf32>
    %21 = vector.multi_reduction <add>, %20, %cst_10 [2] : vector<2x32x2xf32> to vector<2x32xf32>
    %22 = vector.shape_cast %21 : vector<2x32xf32> to vector<2x32x1xf32>
    %23 = vector.shape_cast %7 : vector<32x2xf32> to vector<1x32x2xf32>
    %24 = vector.broadcast %6 : vector<2x32x1xf32> to vector<2x32x2xf32>
    %25 = vector.broadcast %23 : vector<1x32x2xf32> to vector<2x32x2xf32>
    %26 = arith.mulf %24, %25 : vector<2x32x2xf32>
    %cst_11 = arith.constant dense<0.000000e+00> : vector<2x2xf32>
    %27 = vector.multi_reduction <add>, %26, %cst_11 [1] : vector<2x32x2xf32> to vector<2x2xf32>
    %cst_12 = arith.constant 0.000000e+00 : f32
    %28 = vector.broadcast %cst_12 : f32 to vector<2x2xf32>
    %29 = arith.maximumf %27, %28 : vector<2x2xf32>
    %30 = vector.shape_cast %29 : vector<2x2xf32> to vector<2x1x2xf32>
    %31 = vector.shape_cast %8 : vector<32x2xf32> to vector<1x32x2xf32>
    %32 = vector.broadcast %30 : vector<2x1x2xf32> to vector<2x32x2xf32>
    %33 = vector.broadcast %31 : vector<1x32x2xf32> to vector<2x32x2xf32>
    %34 = arith.mulf %32, %33 : vector<2x32x2xf32>
    %cst_13 = arith.constant dense<0.000000e+00> : vector<2x32xf32>
    %35 = vector.multi_reduction <add>, %34, %cst_13 [2] : vector<2x32x2xf32> to vector<2x32xf32>
    %36 = vector.shape_cast %35 : vector<2x32xf32> to vector<2x32x1xf32>
    %37 = arith.addf %22, %36 : vector<2x32x1xf32>
    %38 = arith.negf %37 : vector<2x32x1xf32>
    %39 = math.exp %38 : vector<2x32x1xf32>
    %cst_14 = arith.constant 1.000000e+00 : f32
    %40 = vector.broadcast %cst_14 : f32 to vector<2x32x1xf32>
    %41 = arith.addf %40, %39 : vector<2x32x1xf32>
    %42 = arith.divf %40, %41 : vector<2x32x1xf32>
    %43 = vector.broadcast %42 : vector<2x32x1xf32> to vector<2x32x256xf32>
    %44 = arith.mulf %0, %43 : vector<2x32x256xf32>
    %c0_15 = arith.constant 0 : index
    %c0_16 = arith.constant 0 : index
    %c0_17 = arith.constant 0 : index
    %45 = vector.load %arg3[%c0_15, %c0_16, %c0_17] : memref<2x32x256xf32, #tpu.memory_space<vmem>>, vector<2x32x256xf32>
    tpu.vector_store %arg3[%c0_15, %c0_16, %c0_17], %44 {strides = array<i32>} : memref<2x32x256xf32, #tpu.memory_space<vmem>>, vector<2x32x256xf32>,
    return
  }
}

</mosaic_0001>

<llo_original>
// kernel: tpu_custom_call.1
$region0: #{tpu_custom_call.1}
  #allocation0 [shape = 'u32[]', space=smem, size = 0x4, offset = 0x4, fixed_abs, tag = 'smem constant byte address 0x4 - core index']
  #allocation1 [shape = 'u32[144,128]{1,0:T(1,128)}', space=vmem, size = 0x12000, scoped, tag = 'internal scratch']
  %s0 = inlined_call_operand.hbm [shape: f32[2,32,256], index: 0, kind: input, shape index: {}]
  %s1 = inlined_call_operand.vmem [shape: f32[32,2], index: 1, kind: input, shape index: {}]
  %s2 = inlined_call_operand.vmem [shape: f32[32,2], index: 2, kind: input, shape index: {}]
  %s3 = inlined_call_operand.hbm [shape: f32[2,32,256], index: 3, kind: output, shape index: {}]
  %s4 = sld [smem:[#allocation0]]
  $region26: #{tpu_custom_call.1} parent=0
    _
  %s6 = ssub.s32 1, %s4
  %s7 = scalar_select 0, %s6, %s4
  $region1: #{tpu_custom_call.1} parent=0
    #allocation2 [shape = 'u8[65536]{0}', space=vmem, size = 0x10000, scoped, tag = 'input window, operand 0, single buffered']
    #allocation3 [shape = 's32[1]{0}', space=sflag, size = 0x4, scoped, tag = 'scoped memory for tpu_custom_call.1']
    #allocation4 [shape = 's32[1]{0}', space=sflag, size = 0x4, scoped, tag = 'scoped memory for tpu_custom_call.1']
    #allocation5 [shape = 'u8[65536]{0}', space=vmem, size = 0x10000, scoped, tag = 'output window, operand 0, single buffered']
    %8 = vsyncpa [#allocation3], 0
    %9 = vsyncpa [#allocation4], 0
    // Predicated region
    $region2: #{tpu_custom_call.1} parent=1 // pred_check
      _
    $region3: #{tpu_custom_call.1} parent=1 // pred_check_branch
      %11 = sbr.rel (0) target = $region5
    $region4: #{tpu_custom_call.1} parent=1 // pred_region
      %s13 = ssub.s32 2048, 2048
      %14 = vsyncadd [#allocation3], %s13
      %s15 = sshll.u32 [#allocation2], 4
      %s16 = int_to_ptr.vmem [resolvable:$true] %s15
      %21 = dma.hbm_to_vmem [thread:$0]  %s0, 2048, %s16, [#allocation3], 256, 256, 16
    $region5: #{tpu_custom_call.1} parent=1 // pred_fallthru
      _
    // Predicated region
    $region6: #{tpu_custom_call.1} parent=1 // pred_check
      _
    $region7: #{tpu_custom_call.1} parent=1 // pred_check_branch
      %23 = sbr.rel (0) target = $region9
    $region8: #{tpu_custom_call.1} parent=1 // pred_region
      _
    $region9: #{tpu_custom_call.1} parent=1 // pred_fallthru
      _
    // Predicated region
    $region10: #{tpu_custom_call.1} parent=1 // pred_check
      _
    $region11: #{tpu_custom_call.1} parent=1 // pred_check_branch
      %25 = sbr.rel (0) target = $region13
    $region12: #{tpu_custom_call.1} parent=1 // pred_region
      _
    $region13: #{tpu_custom_call.1} parent=1 // pred_fallthru
      _
    // Predicated region
    $region14: #{tpu_custom_call.1} parent=1 // pred_check
      _
    $region15: #{tpu_custom_call.1} parent=1 // pred_check_branch
      %27 = sbr.rel (0) target = $region17
    $region16: #{tpu_custom_call.1} parent=1 // pred_region
      %28 = dma.done [#allocation3], 2048
    $region17: #{tpu_custom_call.1} parent=1 // pred_fallthru
      _
    %v29 = vld [vmem:[#allocation2] sm:$0xff]
    %v30 = vld [vmem:[#allocation2 + $0x8] sm:$0xff]
    %v31 = vld [vmem:[#allocation2 + $0x10] sm:$0xff]
    %v32 = vld [vmem:[#allocation2 + $0x18] sm:$0xff]
    %v33 = vld [vmem:[#allocation2 + $0x20] sm:$0xff]
    %v34 = vld [vmem:[#allocation2 + $0x28] sm:$0xff]
    %v35 = vld [vmem:[#allocation2 + $0x30] sm:$0xff]
    %v36 = vld [vmem:[#allocation2 + $0x38] sm:$0xff]
    %v37 = vld [vmem:[#allocation2 + $0x40] sm:$0xff]
    %v38 = vld [vmem:[#allocation2 + $0x48] sm:$0xff]
    %v39 = vld [vmem:[#allocation2 + $0x50] sm:$0xff]
    %v40 = vld [vmem:[#allocation2 + $0x58] sm:$0xff]
    %v41 = vld [vmem:[#allocation2 + $0x60] sm:$0xff]
    %v42 = vld [vmem:[#allocation2 + $0x68] sm:$0xff]
    %v43 = vld [vmem:[#allocation2 + $0x70] sm:$0xff]
    %v44 = vld [vmem:[#allocation2 + $0x78] sm:$0xff]
    %v45 = vadd.f32 %v29, %v30
    %46 = vadd.xlane.f32.xlu0 %v45
    %v47 = vpop.xlane.xlu0 %46
    %v48 = vadd.f32 %v31, %v32
    %49 = vadd.xlane.f32.xlu0 %v48
    %v50 = vpop.xlane.xlu0 %49
    %v51 = vadd.f32 %v33, %v34
    %52 = vadd.xlane.f32.xlu0 %v51
    %v53 = vpop.xlane.xlu0 %52
    %v54 = vadd.f32 %v35, %v36
    %55 = vadd.xlane.f32.xlu0 %v54
    %v56 = vpop.xlane.xlu0 %55
    %v57 = vadd.f32 %v37, %v38
    %58 = vadd.xlane.f32.xlu0 %v57
    %v59 = vpop.xlane.xlu0 %58
    %v60 = vadd.f32 %v39, %v40
    %61 = vadd.xlane.f32.xlu0 %v60
    %v62 = vpop.xlane.xlu0 %61
    %v63 = vadd.f32 %v41, %v42
    %64 = vadd.xlane.f32.xlu0 %v63
    %v65 = vpop.xlane.xlu0 %64
    %v66 = vadd.f32 %v43, %v44
    %67 = vadd.xlane.f32.xlu0 %v66
    %v68 = vpop.xlane.xlu0 %67
    %v69 = vrcp.pop 256.0
    %v70 = vmul.f32 %v47, %v69
    %v71 = vmul.f32 %v50, %v69
    %v72 = vmul.f32 %v53, %v69
    %v73 = vmul.f32 %v56, %v69
    %v74 = vmul.f32 %v59, %v69
    %v75 = vmul.f32 %v62, %v69
    %v76 = vmul.f32 %v65, %v69
    %v77 = vmul.f32 %v68, %v69
    %v78 = vmax.f32 %v29, %v30
    %79 = vmax.xlane.f32.xlu0 %v78
    %v80 = vpop.xlane.xlu0 %79
    %v81 = vmax.f32 %v31, %v32
    %82 = vmax.xlane.f32.xlu0 %v81
    %v83 = vpop.xlane.xlu0 %82
    %v84 = vmax.f32 %v33, %v34
    %85 = vmax.xlane.f32.xlu0 %v84
    %v86 = vpop.xlane.xlu0 %85
    %v87 = vmax.f32 %v35, %v36
    %88 = vmax.xlane.f32.xlu0 %v87
    %v89 = vpop.xlane.xlu0 %88
    %v90 = vmax.f32 %v37, %v38
    %91 = vmax.xlane.f32.xlu0 %v90
    %v92 = vpop.xlane.xlu0 %91
    %v93 = vmax.f32 %v39, %v40
    %94 = vmax.xlane.f32.xlu0 %v93
    %v95 = vpop.xlane.xlu0 %94
    %v96 = vmax.f32 %v41, %v42
    %97 = vmax.xlane.f32.xlu0 %v96
    %v98 = vpop.xlane.xlu0 %97
    %v99 = vmax.f32 %v43, %v44
    %100 = vmax.xlane.f32.xlu0 %v99
    %v101 = vpop.xlane.xlu0 %100
    %v102 = vld [vmem:[%s1] sm:$0xff]
    %v103 = vld [vmem:[%s1 + $0x8] sm:$0xff]
    %v104 = vld [vmem:[%s1 + $0x10] sm:$0xff]
    %v105 = vld [vmem:[%s1 + $0x18] sm:$0xff]
    %v106 = vld [vmem:[%s2] sm:$0xff]
    %v107 = vld [vmem:[%s2 + $0x8] sm:$0xff]
    %v108 = vld [vmem:[%s2 + $0x10] sm:$0xff]
    %v109 = vld [vmem:[%s2 + $0x18] sm:$0xff]
    %v110 = vmul.f32 %v70, %v102
    %v111 = vmul.f32 %v71, %v103
    %v112 = vmul.f32 %v72, %v104
    %v113 = vmul.f32 %v73, %v105
    %v114 = vmul.f32 %v74, %v102
    %v115 = vmul.f32 %v75, %v103
    %v116 = vmul.f32 %v76, %v104
    %v117 = vmul.f32 %v77, %v105
    %vm118 = vcmask 15360
    %v119 = vsel %vm118, %v110, 0.0
    %v120 = vsel %vm118, %v111, 0.0
    %v121 = vadd.f32 %v119, %v120
    %v122 = vsel %vm118, %v112, 0.0
    %v123 = vadd.f32 %v121, %v122
    %v124 = vsel %vm118, %v113, 0.0
    %v125 = vadd.f32 %v123, %v124
    %v126 = vrot.slane %v125, 4
    %v127 = vadd.f32 %v125, %v126
    %v128 = vrot.slane %v127, 2
    %v129 = vadd.f32 %v127, %v128
    %v130 = vrot.slane %v129, 1
    %v131 = vadd.f32 %v129, %v130
    %v132 = vsel %vm118, %v114, 0.0
    %v133 = vsel %vm118, %v115, 0.0
    %v134 = vadd.f32 %v132, %v133
    %v135 = vsel %vm118, %v116, 0.0
    %v136 = vadd.f32 %v134, %v135
    %v137 = vsel %vm118, %v117, 0.0
    %v138 = vadd.f32 %v136, %v137
    %v139 = vrot.slane %v138, 4
    %v140 = vadd.f32 %v138, %v139
    %v141 = vrot.slane %v140, 2
    %v142 = vadd.f32 %v140, %v141
    %v143 = vrot.slane %v142, 1
    %v144 = vadd.f32 %v142, %v143
    %v145 = vmax.f32 %v131, 0.0
    %v146 = vmax.f32 %v144, 0.0
    %v147 = vmul.f32 %v145, %v106
    %v148 = vmul.f32 %v145, %v107
    %v149 = vmul.f32 %v145, %v108
    %v150 = vmul.f32 %v145, %v109
    %v151 = vmul.f32 %v146, %v106
    %v152 = vmul.f32 %v146, %v107
    %v153 = vmul.f32 %v146, %v108
    %v154 = vmul.f32 %v146, %v109
    %v155 = vsel %vm118, %v147, 0.0
    %156 = vadd.xlane.f32.xlu0 %v155
    %v157 = vpop.xlane.xlu0 %156
    %v158 = vsel %vm118, %v148, 0.0
    %159 = vadd.xlane.f32.xlu0 %v158
    %v160 = vpop.xlane.xlu0 %159
    %v161 = vsel %vm118, %v149, 0.0
    %162 = vadd.xlane.f32.xlu0 %v161
    %v163 = vpop.xlane.xlu0 %162
    %v164 = vsel %vm118, %v150, 0.0
    %165 = vadd.xlane.f32.xlu0 %v164
    %v166 = vpop.xlane.xlu0 %165
    %v167 = vsel %vm118, %v151, 0.0
    %168 = vadd.xlane.f32.xlu0 %v167
    %v169 = vpop.xlane.xlu0 %168
    %v170 = vsel %vm118, %v152, 0.0
    %171 = vadd.xlane.f32.xlu0 %v170
    %v172 = vpop.xlane.xlu0 %171
    %v173 = vsel %vm118, %v153, 0.0
    %174 = vadd.xlane.f32.xlu0 %v173
    %v175 = vpop.xlane.xlu0 %174
    %v176 = vsel %vm118, %v154, 0.0
    %177 = vadd.xlane.f32.xlu0 %v176
    %v178 = vpop.xlane.xlu0 %177
    %v179 = vmul.f32 %v80, %v102
    %v180 = vmul.f32 %v83, %v103
    %v181 = vmul.f32 %v86, %v104
    %v182 = vmul.f32 %v89, %v105
    %v183 = vmul.f32 %v92, %v102
    %v184 = vmul.f32 %v95, %v103
    %v185 = vmul.f32 %v98, %v104
    %v186 = vmul.f32 %v101, %v105
    %v187 = vsel %vm118, %v179, 0.0
    %v188 = vsel %vm118, %v180, 0.0
    %v189 = vadd.f32 %v187, %v188
    %v190 = vsel %vm118, %v181, 0.0
    %v191 = vadd.f32 %v189, %v190
    %v192 = vsel %vm118, %v182, 0.0
    %v193 = vadd.f32 %v191, %v192
    %v194 = vrot.slane %v193, 4
    %v195 = vadd.f32 %v193, %v194
    %v196 = vrot.slane %v195, 2
    %v197 = vadd.f32 %v195, %v196
    %v198 = vrot.slane %v197, 1
    %v199 = vadd.f32 %v197, %v198
    %v200 = vsel %vm118, %v183, 0.0
    %v201 = vsel %vm118, %v184, 0.0
    %v202 = vadd.f32 %v200, %v201
    %v203 = vsel %vm118, %v185, 0.0
    %v204 = vadd.f32 %v202, %v203
    %v205 = vsel %vm118, %v186, 0.0
    %v206 = vadd.f32 %v204, %v205
    %v207 = vrot.slane %v206, 4
    %v208 = vadd.f32 %v206, %v207
    %v209 = vrot.slane %v208, 2
    %v210 = vadd.f32 %v208, %v209
    %v211 = vrot.slane %v210, 1
    %v212 = vadd.f32 %v210, %v211
    %v213 = vmax.f32 %v199, 0.0
    %v214 = vmax.f32 %v212, 0.0
    %v215 = vmul.f32 %v213, %v106
    %v216 = vmul.f32 %v213, %v107
    %v217 = vmul.f32 %v213, %v108
    %v218 = vmul.f32 %v213, %v109
    %v219 = vmul.f32 %v214, %v106
    %v220 = vmul.f32 %v214, %v107
    %v221 = vmul.f32 %v214, %v108
    %v222 = vmul.f32 %v214, %v109
    %v223 = vsel %vm118, %v215, 0.0
    %224 = vadd.xlane.f32.xlu0 %v223
    %v225 = vpop.xlane.xlu0 %224
    %v226 = vsel %vm118, %v216, 0.0
    %227 = vadd.xlane.f32.xlu0 %v226
    %v228 = vpop.xlane.xlu0 %227
    %v229 = vsel %vm118, %v217, 0.0
    %230 = vadd.xlane.f32.xlu0 %v229
    %v231 = vpop.xlane.xlu0 %230
    %v232 = vsel %vm118, %v218, 0.0
    %233 = vadd.xlane.f32.xlu0 %v232
    %v234 = vpop.xlane.xlu0 %233
    %v235 = vsel %vm118, %v219, 0.0
    %236 = vadd.xlane.f32.xlu0 %v235
    %v237 = vpop.xlane.xlu0 %236
    %v238 = vsel %vm118, %v220, 0.0
    %239 = vadd.xlane.f32.xlu0 %v238
    %v240 = vpop.xlane.xlu0 %239
    %v241 = vsel %vm118, %v221, 0.0
    %242 = vadd.xlane.f32.xlu0 %v241
    %v243 = vpop.xlane.xlu0 %242
    %v244 = vsel %vm118, %v222, 0.0
    %245 = vadd.xlane.f32.xlu0 %v244
    %v246 = vpop.xlane.xlu0 %245
    %v247 = vadd.f32 %v157, %v225
    %v248 = vadd.f32 %v160, %v228
    %v249 = vadd.f32 %v163, %v231
    %v250 = vadd.f32 %v166, %v234
    %v251 = vadd.f32 %v169, %v237
    %v252 = vadd.f32 %v172, %v240
    %v253 = vadd.f32 %v175, %v243
    %v254 = vadd.f32 %v178, %v246
    %v255 = vxor.u32 %v247, 2147483648
    %v256 = vxor.u32 %v248, 2147483648
    %v257 = vxor.u32 %v249, 2147483648
    %v258 = vxor.u32 %v250, 2147483648
    %v259 = vxor.u32 %v251, 2147483648
    %v260 = vxor.u32 %v252, 2147483648
    %v261 = vxor.u32 %v253, 2147483648
    %v262 = vxor.u32 %v254, 2147483648
    %v263 = vmul.f32 %v255, 1.442695
    %v264 = vpow.pop %v263
    %v265 = vmul.f32 %v256, 1.442695
    %v266 = vpow.pop %v265
    %v267 = vmul.f32 %v257, 1.442695
    %v268 = vpow.pop %v267
    %v269 = vmul.f32 %v258, 1.442695
    %v270 = vpow.pop %v269
    %v271 = vmul.f32 %v259, 1.442695
    %v272 = vpow.pop %v271
    %v273 = vmul.f32 %v260, 1.442695
    %v274 = vpow.pop %v273
    %v275 = vmul.f32 %v261, 1.442695
    %v276 = vpow.pop %v275
    %v277 = vmul.f32 %v262, 1.442695
    %v278 = vpow.pop %v277
    %v279 = vadd.f32 %v264, 1.0
    %v280 = vadd.f32 %v266, 1.0
    %v281 = vadd.f32 %v268, 1.0
    %v282 = vadd.f32 %v270, 1.0
    %v283 = vadd.f32 %v272, 1.0
    %v284 = vadd.f32 %v274, 1.0
    %v285 = vadd.f32 %v276, 1.0
    %v286 = vadd.f32 %v278, 1.0
    %v287 = vrcp.pop %v279
    %v288 = vmul.f32 1.0, %v287
    %v289 = vrcp.pop %v280
    %v290 = vmul.f32 1.0, %v289
    %v291 = vrcp.pop %v281
    %v292 = vmul.f32 1.0, %v291
    %v293 = vrcp.pop %v282
    %v294 = vmul.f32 1.0, %v293
    %v295 = vrcp.pop %v283
    %v296 = vmul.f32 1.0, %v295
    %v297 = vrcp.pop %v284
    %v298 = vmul.f32 1.0, %v297
    %v299 = vrcp.pop %v285
    %v300 = vmul.f32 1.0, %v299
    %v301 = vrcp.pop %v286
    %v302 = vmul.f32 1.0, %v301
    %v303 = vmul.f32 %v29, %v288
    %v304 = vmul.f32 %v30, %v288
    %v305 = vmul.f32 %v31, %v290
    %v306 = vmul.f32 %v32, %v290
    %v307 = vmul.f32 %v33, %v292
    %v308 = vmul.f32 %v34, %v292
    %v309 = vmul.f32 %v35, %v294
    %v310 = vmul.f32 %v36, %v294
    %v311 = vmul.f32 %v37, %v296
    %v312 = vmul.f32 %v38, %v296
    %v313 = vmul.f32 %v39, %v298
    %v314 = vmul.f32 %v40, %v298
    %v315 = vmul.f32 %v41, %v300
    %v316 = vmul.f32 %v42, %v300
    %v317 = vmul.f32 %v43, %v302
    %v318 = vmul.f32 %v44, %v302
    %319 = vst [vmem:[#allocation5] sm:$0xff] %v303
    %320 = vst [vmem:[#allocation5 + $0x8] sm:$0xff] %v304
    %321 = vst [vmem:[#allocation5 + $0x10] sm:$0xff] %v305
    %322 = vst [vmem:[#allocation5 + $0x18] sm:$0xff] %v306
    %323 = vst [vmem:[#allocation5 + $0x20] sm:$0xff] %v307
    %324 = vst [vmem:[#allocation5 + $0x28] sm:$0xff] %v308
    %325 = vst [vmem:[#allocation5 + $0x30] sm:$0xff] %v309
    %326 = vst [vmem:[#allocation5 + $0x38] sm:$0xff] %v310
    %327 = vst [vmem:[#allocation5 + $0x40] sm:$0xff] %v311
    %328 = vst [vmem:[#allocation5 + $0x48] sm:$0xff] %v312
    %329 = vst [vmem:[#allocation5 + $0x50] sm:$0xff] %v313
    %330 = vst [vmem:[#allocation5 + $0x58] sm:$0xff] %v314
    %331 = vst [vmem:[#allocation5 + $0x60] sm:$0xff] %v315
    %332 = vst [vmem:[#allocation5 + $0x68] sm:$0xff] %v316
    %333 = vst [vmem:[#allocation5 + $0x70] sm:$0xff] %v317
    %334 = vst [vmem:[#allocation5 + $0x78] sm:$0xff] %v318
    // Predicated region
    $region18: #{tpu_custom_call.1} parent=1 // pred_check
      _
    $region19: #{tpu_custom_call.1} parent=1 // pred_check_branch
      %336 = sbr.rel (0) target = $region21
    $region20: #{tpu_custom_call.1} parent=1 // pred_region
      %s338 = ssub.s32 2048, 2048
      %339 = vsyncadd [#allocation4], %s338
      %s340 = sshll.u32 [#allocation5], 4
      %s341 = int_to_ptr.vmem [resolvable:$true] %s340
      %346 = dma.vmem_to_hbm [thread:$0]  %s341, 2048, %s3, [#allocation4], 256, 256, 16
    $region21: #{tpu_custom_call.1} parent=1 // pred_fallthru
      _
    // Predicated region
    $region22: #{tpu_custom_call.1} parent=1 // pred_check
      _
    $region23: #{tpu_custom_call.1} parent=1 // pred_check_branch
      %348 = sbr.rel (0) target = $region25
    $region24: #{tpu_custom_call.1} parent=1 // pred_region
      %349 = dma.done [#allocation4], 2048
    $region25: #{tpu_custom_call.1} parent=1 // pred_fallthru
      _
    %350 = vsyncpa [#allocation3], 1
    %351 = vsyncpa [#allocation4], 1

</llo_original>
